<compile_context>
chip_gen: v5e
topology: v5e:2x2
jax: 0.10.0
libtpu: 0.0.40
codegen_flags: <defaults>
</compile_context>

<pallas_src>
import functools
import math

import jax
import jax.numpy as jnp
from jax import lax
from jax.experimental import pallas as pl
from jax.experimental.pallas import tpu as pltpu

F32 = jnp.float32
BF16 = jnp.bfloat16


def _pick_tile(dim, candidates):
    """Largest candidate tile that divides `dim`, else the full dim."""
    for c in candidates:
        if c <= dim and dim % c == 0:
            return c
    return dim


# ----------------------------- GEMM kernels ---------------------------------

def _matmul_kernel(act, has_bias, *refs):
    """out = act(x @ w [+ b]); K-reduction over grid axis 2, f32 accumulator."""
    if has_bias:
        x_ref, w_ref, b_ref, o_ref, acc_ref = refs
    else:
        x_ref, w_ref, o_ref, acc_ref = refs
        b_ref = None

    @pl.when(pl.program_id(2) == 0)
    def _():
        acc_ref[...] = jnp.zeros_like(acc_ref)

    acc_ref[...] += jnp.dot(x_ref[...].astype(BF16), w_ref[...],
                            preferred_element_type=jnp.float32)

    @pl.when(pl.program_id(2) == pl.num_programs(2) - 1)
    def _():
        h = acc_ref[...]
        if has_bias:
            h = h + b_ref[...]
        if act == "gelu":
            # OpenAI-GPT gelu (tanh approximation), exactly as in the reference.
            c = math.sqrt(2.0 / math.pi)
            h = 0.5 * h * (1.0 + jnp.tanh(c * (h + 0.044715 * h * h * h)))
        o_ref[...] = h.astype(o_ref.dtype)


def _matmul_add_ln_kernel(eps, has_bias, *refs):
    """out = LayerNorm(resid + x @ w [+ b]); LN fused into the GEMM epilogue."""
    if has_bias:
        x_ref, w_ref, b_ref, r_ref, g_ref, bt_ref, o_ref, acc_ref = refs
    else:
        x_ref, w_ref, r_ref, g_ref, bt_ref, o_ref, acc_ref = refs
        b_ref = None
    k = pl.program_id(1)

    @pl.when(k == 0)
    def _():
        acc_ref[...] = jnp.zeros_like(acc_ref)

    acc_ref[...] += jnp.dot(x_ref[...].astype(BF16), w_ref[...],
                            preferred_element_type=jnp.float32)

    @pl.when(k == pl.num_programs(1) - 1)
    def _():
        h = acc_ref[...] + r_ref[...]
        if has_bias:
            h = h + b_ref[...]
        u = jnp.mean(h, axis=-1, keepdims=True)
        d = h - u
        s = jnp.mean(d * d, axis=-1, keepdims=True)
        o_ref[...] = (g_ref[...] * (d * lax.rsqrt(s + eps))
                      + bt_ref[...]).astype(o_ref.dtype)


# --------------------------- attention kernel -------------------------------

def _attn_core_kernel(n_head, hd, topk, tq, eps,
                      lam_ref, qkv_ref, sqkv_ref, m1_ref, m2_ref,
                      rnsq_ref, rnst_ref, g_ref, o_ref):
    # Per-grid-step blocks (grid = (batch, query-block)):
    #   qkv  : (T, 3D) bf16   channels-last fused q|k|v for one batch element
    #   sqkv : (L, 3D) bf16   landmark rows of qkv
    #   m1,m2: (L, 2H) f32    per-head landmark scales (transposed on host)
    #   rnsq : (tq, topk) i32 rns neighbor ids of the query rows
    #   rnst : (topk, T) i32  rns neighbor ids of all rows, transposed
    #   g    : (1, 2hd) f32   subln RMSNorm weight
    #   o    : (tq, D) bf16   merged-head output rows
    two_h = 2 * n_head
    hd2 = 2 * hd
    D = two_h * hd
    T = qkv_ref.shape[0]
    lam_full = lam_ref[0]
    lam_init = lam_ref[1]

    qi = pl.program_id(1)
    qstart = pl.multiple_of(qi * tq, tq)

    # --- rns mask tile (tq, T), built from int32 indices (no (B,T,T) in HBM).
    # mask[i, j] = (j in rns[qstart+i]) & (qstart+i in rns[j])
    col = lax.broadcasted_iota(jnp.int32, (tq, T), 1)
    row = lax.broadcasted_iota(jnp.int32, (tq, T), 0) + qstart
    rowmask = None
    colmask = None
    for t in range(topk):
        rm = rnsq_ref[:, t:t + 1] == col        # (tq, T)
        cm = rnst_ref[t:t + 1, :] == row        # (tq, T)
        rowmask = rm if rowmask is None else (rowmask | rm)
        colmask = cm if colmask is None else (colmask | cm)
    mask = rowmask & colmask

    # Static coefficient table of the reference differential combine
    # (valid for n_head == 2):  out[h] = sum_j (a + b*lam_full) * softmax_j @ v_h
    coeff = [[[0.0, 0.0] for _ in range(two_h)] for _ in range(n_head)]
    for h in range(n_head):
        coeff[h][2 * h][0] += 1.0        # + w[:, h, 0]
        coeff[h][2 * h + 1][1] += -1.0   # - lam * w[:, h, 1]
        coeff[h][2 + h][0] += 1.0        # + (1 - lam) * w[:, 1, h]
        coeff[h][2 + h][1] += -1.0
        coeff[h][h][0] += -1.0           # - w[:, 0, h]

    acc = [jnp.zeros((tq, hd2), jnp.float32) for _ in range(n_head)]

    # Streamed differential combine: only one (tq, T) probability matrix live.
    for j in range(two_h):
        needed = [h for h in range(n_head) if coeff[h][j] != [0.0, 0.0]]
        if not needed:
            continue
        q_j = qkv_ref[pl.ds(qstart, tq), j * hd:(j + 1) * hd]      # (tq, hd) bf16
        k_j = qkv_ref[:, D + j * hd:D + (j + 1) * hd]              # (T, hd)  bf16

        # Landmark L2-normalize (no epsilon, as in the reference) + m1/m2 scale.
        sq_j = sqkv_ref[:, j * hd:(j + 1) * hd].astype(jnp.float32)       # (L, hd)
        sk_j = sqkv_ref[:, D + j * hd:D + (j + 1) * hd].astype(jnp.float32)
        sq_j = (sq_j * lax.rsqrt(jnp.sum(sq_j * sq_j, axis=-1, keepdims=True))
                * m1_ref[:, j:j + 1])
        sk_j = (sk_j * lax.rsqrt(jnp.sum(sk_j * sk_j, axis=-1, keepdims=True))
                * m2_ref[:, j:j + 1])

        # Reassociated score product:  w = (q_j @ (sk_j^T @ sq_j)) @ k_j^T
        # -> contracts over hd (MXU-friendly) instead of L (=num_landmark).
        m_j = lax.dot_general(sk_j.astype(BF16), sq_j.astype(BF16),
                              (((0,), (0,)), ((), ())),
                              preferred_element_type=jnp.float32)  # (hd, hd)
        qm = jnp.dot(q_j, m_j.astype(BF16),
                     preferred_element_type=jnp.float32)           # (tq, hd)
        w = lax.dot_general(qm.astype(BF16), k_j,
                            (((1,), (1,)), ((), ())),
                            preferred_element_type=jnp.float32)    # (tq, T)

        w = jnp.where(mask, w, -1000000000.0)
        w = w - jnp.max(w, axis=-1, keepdims=True)
        e = jnp.exp(w)
        p = (e * pl.reciprocal(jnp.sum(e, axis=-1, keepdims=True),
                               approx=True)).astype(BF16)

        for h in needed:
            a0, b0 = coeff[h][j]
            c = a0 + b0 * lam_full
            v_h = qkv_ref[:, 2 * D + h * hd2:2 * D + (h + 1) * hd2]  # (T, hd2)
            acc[h] = acc[h] + c * jnp.dot(p, v_h,
                                          preferred_element_type=jnp.float32)

    # subln RMSNorm over 2*head_dim, * (1 - lambda_init), merged-head store.
    g = g_ref[...]                                                  # (1, hd2)
    scale = 1.0 - lam_init
    for h in range(n_head):
        av = acc[h]
        ms = jnp.mean(av * av, axis=-1, keepdims=True)
        y = av * lax.rsqrt(ms + eps) * g * scale
        o_ref[:, h * hd2:(h + 1) * hd2] = y.astype(o_ref.dtype)


# ------------------------------ wrappers -------------------------------------

def matmul_bias(x2d, w, b=None, *, act=None, out_dtype=F32):
    """(M,K) @ (K,N) [+ b], optional GELU; tiled over M, N and K."""
    M, K = x2d.shape
    N = w.shape[1]
    # Conservative (v7x-safe) tiles; at toy sizes they collapse to full dims.
    tm = _pick_tile(M, (256, 128))
    tn = _pick_tile(N, (512, 256, 128))
    tk = _pick_tile(K, (512, 256))
    has_bias = b is not None
    in_specs = [pl.BlockSpec((tm, tk), lambda i, j, k: (i, k)),
                pl.BlockSpec((tk, tn), lambda i, j, k: (k, j))]
    args = [x2d, w]
    if has_bias:
        in_specs.append(pl.BlockSpec((1, tn), lambda i, j, k: (0, j)))
        args.append(b.reshape(1, N).astype(F32))
    return pl.pallas_call(
        functools.partial(_matmul_kernel, act, has_bias),
        out_shape=jax.ShapeDtypeStruct((M, N), out_dtype),
        grid=(M // tm, N // tn, K // tk),
        in_specs=in_specs,
        out_specs=pl.BlockSpec((tm, tn), lambda i, j, k: (i, j)),
        scratch_shapes=[pltpu.VMEM((tm, tn), jnp.float32)],
        compiler_params=pltpu.CompilerParams(
            dimension_semantics=("parallel", "parallel", "arbitrary")),
    )(*args)


def matmul_add_ln(x2d, w, resid, g, beta, b=None, *, eps=1e-5):
    """LayerNorm(resid + x @ w [+ b]); tiled over M and K, full N per tile."""
    M, K = x2d.shape
    N = w.shape[1]
    tm = _pick_tile(M, (128,))          # v7x-safe; bump on v6e if desired
    tk = _pick_tile(K, (256,))
    has_bias = b is not None
    in_specs = [pl.BlockSpec((tm, tk), lambda i, k: (i, k)),
                pl.BlockSpec((tk, N), lambda i, k: (k, 0))]
    args = [x2d, w]
    if has_bias:
        in_specs.append(pl.BlockSpec((1, N), lambda i, k: (0, 0)))
        args.append(b.reshape(1, N).astype(F32))
    in_specs += [pl.BlockSpec((tm, N), lambda i, k: (i, 0)),
                 pl.BlockSpec((1, N), lambda i, k: (0, 0)),
                 pl.BlockSpec((1, N), lambda i, k: (0, 0))]
    args += [resid, g.reshape(1, N), beta.reshape(1, N)]
    return pl.pallas_call(
        functools.partial(_matmul_add_ln_kernel, eps, has_bias),
        out_shape=jax.ShapeDtypeStruct((M, N), F32),
        grid=(M // tm, K // tk),
        in_specs=in_specs,
        out_specs=pl.BlockSpec((tm, N), lambda i, k: (i, 0)),
        scratch_shapes=[pltpu.VMEM((tm, N), jnp.float32)],
        compiler_params=pltpu.CompilerParams(
            dimension_semantics=("parallel", "arbitrary")),
    )(*args)


def attention_core(lam, qkv3, sqkv, m1_t, m2_t, rns_q, rns_t, subln_g,
                   *, n_head, head_dim, eps=1e-5):
    """Landmark / differential attention, channels-last in/out, query-tiled."""
    B, T, threeD = qkv3.shape
    D = threeD // 3
    hd = head_dim
    hd2 = 2 * hd
    two_h = 2 * n_head
    L = sqkv.shape[1]
    topk = rns_q.shape[2]
    tq = _pick_tile(T, (256, 128))      # query block (second parallel axis)
    nq = T // tq
    kern = functools.partial(_attn_core_kernel, n_head, hd, topk, tq, eps)
    return pl.pallas_call(
        kern,
        out_shape=jax.ShapeDtypeStruct((B, T, D), BF16),
        grid=(B, nq),
        in_specs=[
            pl.BlockSpec(memory_space=pltpu.MemorySpace.SMEM),          # lam (2,)
            pl.BlockSpec((pl.Squeezed(), T, threeD), lambda b, q: (b, 0, 0)),
            pl.BlockSpec((pl.Squeezed(), L, threeD), lambda b, q: (b, 0, 0)),
            pl.BlockSpec((L, two_h), lambda b, q: (0, 0)),
            pl.BlockSpec((L, two_h), lambda b, q: (0, 0)),
            pl.BlockSpec((pl.Squeezed(), tq, topk), lambda b, q: (b, q, 0)),
            pl.BlockSpec((pl.Squeezed(), topk, T), lambda b, q: (b, 0, 0)),
            pl.BlockSpec((1, hd2), lambda b, q: (0, 0)),
        ],
        out_specs=pl.BlockSpec((pl.Squeezed(), tq, D), lambda b, q: (b, q, 0)),
        compiler_params=pltpu.CompilerParams(
            dimension_semantics=("parallel", "parallel")),
    )(lam, qkv3, sqkv, m1_t, m2_t, rns_q, rns_t, subln_g)


# ------------------------------ parameters -----------------------------------

def init_params(key, D, n_head, L):
    hd = D // n_head // 2
    two_h = 2 * n_head
    ks = jax.random.split(key, 12)
    std = 0.02
    wq = jax.random.normal(ks[0], (D, D), F32) * std      # q_proj (no bias)
    wk = jax.random.normal(ks[1], (D, D), F32) * std      # k_proj
    wv = jax.random.normal(ks[2], (D, D), F32) * std      # v_proj
    m1 = jax.random.normal(ks[4], (two_h, L, 1), F32) * math.sqrt(2.0 / L)
    m2 = jax.random.normal(ks[5], (two_h, 1, L), F32) * math.sqrt(2.0 / L)
    p = {
        # Weights stored in bf16 and q|k|v pre-fused at init time (no per-call
        # astype / concat HBM copies).
        'w_qkv': jnp.concatenate([wq, wk, wv], axis=1).astype(BF16),  # (D,3D)
        'wo': (jax.random.normal(ks[3], (D, D), F32) * std).astype(BF16),
        'm1_t': jnp.transpose(m1.reshape(two_h, L)),      # (L, 2H)
        'm2_t': jnp.transpose(m2.reshape(two_h, L)),      # (L, 2H)
        'lq1': jax.random.normal(ks[6], (hd,), F32) * 0.1,
        'lk1': jax.random.normal(ks[7], (hd,), F32) * 0.1,
        'lq2': jax.random.normal(ks[8], (hd,), F32) * 0.1,
        'lk2': jax.random.normal(ks[9], (hd,), F32) * 0.1,
        'subln_g': jnp.ones((2 * hd,), F32),              # RMSNorm weight
        'ln1_g': jnp.ones((D,), F32), 'ln1_b': jnp.zeros((D,), F32),
        'ln2_g': jnp.ones((D,), F32), 'ln2_b': jnp.zeros((D,), F32),
        'w_fc': (jax.random.normal(ks[10], (D, 4 * D), F32) * std).astype(BF16),
        'b_fc': jnp.zeros((4 * D,), F32),
        'w_pr': (jax.random.normal(ks[11], (4 * D, D), F32) * std).astype(BF16),
        'b_pr': jnp.zeros((D,), F32),
    }
    return p


# ------------------------------ Block forward --------------------------------

def block_forward(l, x, num_landmark, rns_indices, params, *,
                  n_head, landmark_key):
    B, T, D = x.shape
    hd = D // n_head // 2
    hd2 = 2 * hd
    assert n_head == 2, "reference differential combine requires n_head == 2"
    x2 = x.reshape(B * T, D)

    # Fused q/k/v projection (Linear layers, no bias); bf16 activation output.
    qkv = matmul_bias(x2, params['w_qkv'], out_dtype=BF16)        # (BT, 3D) bf16
    qkv3 = qkv.reshape(B, T, 3 * D)

    # TODO(synk): reference picks landmarks with python `random.sample`;
    # here a deterministic PRNG permutation is used instead.
    landmark = jax.random.permutation(landmark_key, T)[:num_landmark]
    sqkv = qkv3[:, landmark, :]                                   # (B, L, 3D)

    # rns indices go straight to the kernel (mask tiles are built in-kernel).
    rns_q = rns_indices.astype(jnp.int32)                         # (B, T, topk)
    rns_t = jnp.swapaxes(rns_q, 1, 2)                             # (B, topk, T)

    # scalar lambdas (Block is constructed with scale=False -> no w scaling)
    lam_init = 0.8 - 0.6 * math.exp(-0.3 * l)
    lam_full = (jnp.exp(jnp.sum(params['lq1'] * params['lk1']))
                - jnp.exp(jnp.sum(params['lq2'] * params['lk2']))
                + lam_init)
    lam = jnp.stack([lam_full.astype(F32), jnp.asarray(lam_init, F32)])

    a = attention_core(lam, qkv3, sqkv, params['m1_t'], params['m2_t'],
                       rns_q, rns_t, params['subln_g'].reshape(1, hd2),
                       n_head=n_head, head_dim=hd)                # (B, T, D) bf16

    attn2 = a.reshape(B * T, D)          # heads already merged by the kernel
    # resid_dropout / mlp dropout are identity in eval mode.

    # attn c_proj (no bias) fused with residual add + ln_1
    n = matmul_add_ln(attn2, params['wo'], x2,
                      params['ln1_g'], params['ln1_b'])           # ln_1(x + a)
    # TODO(synk): cfg.MODEL.AFN assumed to be 'gelu'.
    h = matmul_bias(n, params['w_fc'], params['b_fc'],
                    act="gelu", out_dtype=BF16)                   # gelu(c_fc)
    # mlp c_proj fused with residual add + ln_2
    out = matmul_add_ln(h, params['w_pr'], n,
                        params['ln2_g'], params['ln2_b'],
                        b=params['b_pr'])                         # ln_2(n + m)
    return out.reshape(B, T, D)


# --------------------------------- main ---------------------------------------

if __name__ == "__main__":
    key = jax.random.PRNGKey(0)
    B, T, D = 2, 16, 32          # batch, seq, n_embd
    n_head = 2                   # cfg.MODEL.N_HEAD (must be 2, see combine)
    num_landmark = 4             # == cfg.MODEL.LANDMARK
    topk = 5                     # rns neighbor count
    layer_idx = 1

    kp, kx, kr, kl = jax.random.split(key, 4)
    params = init_params(kp, D, n_head, num_landmark)
    x = jax.random.normal(kx, (B, T, D), F32)
    rns_indices = jax.random.randint(kr, (B, T, topk), 0, T, dtype=jnp.int32)

    out = block_forward(layer_idx, x, num_landmark, rns_indices, params,
                        n_head=n_head, landmark_key=kl)
    jax.block_until_ready(out)
    assert out.shape == (B, T, D) and out.dtype == F32
    print("KERNEL_OK")
</pallas_src>

<mosaic_0001>
module attributes {stable_mosaic.version = 11 : i64} {
  func.func @_matmul_kernel(%arg0: i32, %arg1: i32, %arg2: i32, %arg3: memref<32x32xf32, #tpu.memory_space<vmem>>, %arg4: memref<32x96xbf16, #tpu.memory_space<vmem>>, %arg5: memref<32x96xbf16, #tpu.memory_space<vmem>>, %arg6: memref<32x96xf32, #tpu.memory_space<vmem>>) attributes {dimension_semantics = [#tpu.dimension_semantics<parallel>, #tpu.dimension_semantics<parallel>, #tpu.dimension_semantics<arbitrary>], iteration_bounds = array<i64: 1, 1, 1>, scalar_prefetch = 0 : i64, scratch_operands = 1 : i64, tpu.core_type = #tpu.core_type<tc>, window_params = [{transform_indices = @transform_0, window_bounds = array<i64: 32, 32>}, {transform_indices = @transform_1, window_bounds = array<i64: 32, 96>}, {transform_indices = @transform_2, window_bounds = array<i64: 32, 96>}]} {
    %c0_i32 = arith.constant 0 : i32
    %0 = arith.cmpi eq, %arg2, %c0_i32 : i32
    %1 = arith.extui %0 : i1 to i32
    %c0_i32_0 = arith.constant 0 : i32
    %2 = arith.cmpi ne, %1, %c0_i32_0 : i32
    scf.if %2 {
      %cst_10 = arith.constant 0.000000e+00 : f32
      %13 = vector.broadcast %cst_10 : f32 to vector<32x96xf32>
      %c0_11 = arith.constant 0 : index
      %c0_12 = arith.constant 0 : index
      %14 = vector.load %arg6[%c0_11, %c0_12] : memref<32x96xf32, #tpu.memory_space<vmem>>, vector<32x96xf32>
      tpu.vector_store %arg6[%c0_11, %c0_12], %13 {strides = array<i32>} : memref<32x96xf32, #tpu.memory_space<vmem>>, vector<32x96xf32>,
    } else {
    }
    %c0 = arith.constant 0 : index
    %c0_1 = arith.constant 0 : index
    %3 = vector.load %arg6[%c0, %c0_1] : memref<32x96xf32, #tpu.memory_space<vmem>>, vector<32x96xf32>
    %c0_2 = arith.constant 0 : index
    %c0_3 = arith.constant 0 : index
    %4 = vector.load %arg3[%c0_2, %c0_3] : memref<32x32xf32, #tpu.memory_space<vmem>>, vector<32x32xf32>
    %5 = arith.truncf %4 : vector<32x32xf32> to vector<32x32xbf16>
    %c0_4 = arith.constant 0 : index
    %c0_5 = arith.constant 0 : index
    %6 = vector.load %arg4[%c0_4, %c0_5] : memref<32x96xbf16, #tpu.memory_space<vmem>>, vector<32x96xbf16>
    %cst = arith.constant dense<0.000000e+00> : vector<32x96xf32>
    %7 = tpu.matmul %5, %6, %cst {dimension_numbers = #tpu.dot_dimension_numbers<[1], [0], [0], [1], [0, 0, 1, 1], [], []>} : vector<32x32xbf16>, vector<32x96xbf16>, vector<32x96xf32> -> vector<32x96xf32>
    %8 = arith.addf %3, %7 : vector<32x96xf32>
    %c0_6 = arith.constant 0 : index
    %c0_7 = arith.constant 0 : index
    %9 = vector.load %arg6[%c0_6, %c0_7] : memref<32x96xf32, #tpu.memory_space<vmem>>, vector<32x96xf32>
    tpu.vector_store %arg6[%c0_6, %c0_7], %8 {strides = array<i32>} : memref<32x96xf32, #tpu.memory_space<vmem>>, vector<32x96xf32>,
    %c0_i32_8 = arith.constant 0 : i32
    %10 = arith.cmpi eq, %arg2, %c0_i32_8 : i32
    %11 = arith.extui %10 : i1 to i32
    %c0_i32_9 = arith.constant 0 : i32
    %12 = arith.cmpi ne, %11, %c0_i32_9 : i32
    scf.if %12 {
      %c0_10 = arith.constant 0 : index
      %c0_11 = arith.constant 0 : index
      %13 = vector.load %arg6[%c0_10, %c0_11] : memref<32x96xf32, #tpu.memory_space<vmem>>, vector<32x96xf32>
      %14 = arith.truncf %13 : vector<32x96xf32> to vector<32x96xbf16>
      %c0_12 = arith.constant 0 : index
      %c0_13 = arith.constant 0 : index
      %15 = vector.load %arg5[%c0_12, %c0_13] : memref<32x96xbf16, #tpu.memory_space<vmem>>, vector<32x96xbf16>
      tpu.vector_store %arg5[%c0_12, %c0_13], %14 {strides = array<i32>} : memref<32x96xbf16, #tpu.memory_space<vmem>>, vector<32x96xbf16>,
    } else {
    }
    return
  }
  func.func @transform_0(%arg0: i32, %arg1: i32, %arg2: i32) -> (i32, i32) {
    %c0_i32 = arith.constant 0 : i32
    return %arg0, %arg2 : i32, i32
  }
  func.func @transform_1(%arg0: i32, %arg1: i32, %arg2: i32) -> (i32, i32) {
    %c0_i32 = arith.constant 0 : i32
    return %arg2, %arg1 : i32, i32
  }
  func.func @transform_2(%arg0: i32, %arg1: i32, %arg2: i32) -> (i32, i32) {
    %c0_i32 = arith.constant 0 : i32
    return %arg0, %arg1 : i32, i32
  }
}

</mosaic_0001>

<llo_original>
// kernel: tpu_custom_call.1
$region0: #{tpu_custom_call.1}
  #allocation0 [shape = 'u32[]', space=smem, size = 0x4, offset = 0x4, fixed_abs, tag = 'smem constant byte address 0x4 - core index']
  #allocation1 [shape = 'u32[72,128]{1,0:T(1,128)}', space=vmem, size = 0x9000, scoped, tag = 'internal scratch']
  #allocation2 [shape = 'f32[32,96]{1,0:T(8,128)}', space=vmem, size = 0x4000, scoped, tag = 'scratch operand']
  %s0 = inlined_call_operand.hbm [shape: f32[32,32], index: 0, kind: input, shape index: {}]
  %s1 = inlined_call_operand.hbm [shape: bf16[32,96], index: 1, kind: input, shape index: {}]
  %s2 = inlined_call_operand.hbm [shape: bf16[32,96], index: 2, kind: output, shape index: {}]
  %s3 = sld [smem:[#allocation0]]
  $region34: #{tpu_custom_call.1} parent=0
    _
  %s5 = ssub.s32 1, %s3
  %s6 = scalar_select 0, %s5, %s3
  $region1: #{tpu_custom_call.1} parent=0
    #allocation3 [shape = 'u8[16384]{0}', space=vmem, size = 0x4000, scoped, tag = 'input window, operand 0, single buffered']
    #allocation4 [shape = 's32[1]{0}', space=sflag, size = 0x4, scoped, tag = 'scoped memory for tpu_custom_call.1']
    #allocation5 [shape = 's32[1]{0}', space=sflag, size = 0x4, scoped, tag = 'scoped memory for tpu_custom_call.1']
    #allocation6 [shape = 'u8[8192]{0}', space=vmem, size = 0x2000, scoped, tag = 'input window, operand 1, single buffered']
    #allocation7 [shape = 's32[1]{0}', space=sflag, size = 0x4, scoped, tag = 'scoped memory for tpu_custom_call.1']
    #allocation8 [shape = 'u8[8192]{0}', space=vmem, size = 0x2000, scoped, tag = 'output window, operand 0, single buffered']
    %7 = vsyncpa [#allocation4], 0
    %8 = vsyncpa [#allocation7], 0
    %9 = vsyncpa [#allocation5], 0
    // Predicated region
    $region2: #{tpu_custom_call.1} parent=1 // pred_check
      _
    $region3: #{tpu_custom_call.1} parent=1 // pred_check_branch
      %11 = sbr.rel (0) target = $region5
    $region4: #{tpu_custom_call.1} parent=1 // pred_region
      %13 = vsyncadd [#allocation4], 0
      %s14 = sshll.u32 %s0, 4
      %s15 = int_to_ptr.hbm [resolvable:$true] %s14
      %s16 = sshll.u32 [#allocation3], 4
      %s17 = int_to_ptr.vmem [resolvable:$true] %s16
      %22 = dma.hbm_to_vmem [thread:$0]  %s15, 512, %s17, [#allocation4], 128, 128, 8
    $region5: #{tpu_custom_call.1} parent=1 // pred_fallthru
      _
    // Predicated region
    $region6: #{tpu_custom_call.1} parent=1 // pred_check
      _
    $region7: #{tpu_custom_call.1} parent=1 // pred_check_branch
      %24 = sbr.rel (0) target = $region9
    $region8: #{tpu_custom_call.1} parent=1 // pred_region
      %26 = vsyncadd [#allocation7], 0
      %s27 = sshll.u32 %s1, 4
      %s28 = int_to_ptr.hbm [resolvable:$true] %s27
      %s29 = sshll.u32 [#allocation6], 4
      %s30 = int_to_ptr.vmem [resolvable:$true] %s29
      %35 = dma.hbm_to_vmem [thread:$0]  %s28, 256, %s30, [#allocation7], 64, 64, 4
    $region9: #{tpu_custom_call.1} parent=1 // pred_fallthru
      _
    // Predicated region
    $region10: #{tpu_custom_call.1} parent=1 // pred_check
      _
    $region11: #{tpu_custom_call.1} parent=1 // pred_check_branch
      %37 = sbr.rel (0) target = $region13
    $region12: #{tpu_custom_call.1} parent=1 // pred_region
      %39 = dma.done [#allocation4], 512
    $region13: #{tpu_custom_call.1} parent=1 // pred_fallthru
      _
    // Predicated region
    $region14: #{tpu_custom_call.1} parent=1 // pred_check
      _
    $region15: #{tpu_custom_call.1} parent=1 // pred_check_branch
      %41 = sbr.rel (0) target = $region17
    $region16: #{tpu_custom_call.1} parent=1 // pred_region
      %43 = dma.done [#allocation7], 256
    $region17: #{tpu_custom_call.1} parent=1 // pred_fallthru
      _
    %p45 = scmp.eq.s32.totalorder 0, 0
    // Predicated region
    $region18: #{tpu_custom_call.1} parent=1 // pred_check
      %p46 = pneg %p45
    $region19: #{tpu_custom_call.1} parent=1 // pred_check_branch
      %48 = sbr.rel (%p46) target = $region21
    $region20: #{tpu_custom_call.1} parent=1 // pred_region
      %vm49 = vcmask 785408
      %50 = vst.msk [vmem:[#allocation2] sm:$0xff] %vm49, 0.0
      %51 = vst.msk [vmem:[#allocation2 + $0x8] sm:$0xff] %vm49, 0.0
      %52 = vst.msk [vmem:[#allocation2 + $0x10] sm:$0xff] %vm49, 0.0
      %53 = vst.msk [vmem:[#allocation2 + $0x18] sm:$0xff] %vm49, 0.0
    $region21: #{tpu_custom_call.1} parent=1 // pred_fallthru
      _
    %v54 = vld [vmem:[#allocation2] sm:$0xff]
    %v55 = vld [vmem:[#allocation2 + $0x8] sm:$0xff]
    %v56 = vld [vmem:[#allocation2 + $0x10] sm:$0xff]
    %v57 = vld [vmem:[#allocation2 + $0x18] sm:$0xff]
    %v58 = vld [vmem:[#allocation3] sm:$0xff]
    %v59 = vld [vmem:[#allocation3 + $0x8] sm:$0xff]
    %v60 = vld [vmem:[#allocation3 + $0x10] sm:$0xff]
    %v61 = vld [vmem:[#allocation3 + $0x18] sm:$0xff]
    %v62 = vpack.c.bf16 %v59, %v58
    %v63 = vpack.c.bf16 %v61, %v60
    %v64 = vld [vmem:[#allocation6] sm:$0xf]
    %v65 = vld [vmem:[#allocation6 + $0x4] sm:$0xf]
    %v66 = vld [vmem:[#allocation6 + $0x8] sm:$0xf]
    %v67 = vld [vmem:[#allocation6 + $0xc] sm:$0xf]
    %v72 = vunpack.c.l.b16 %v64
    %v73 = vunpack.c.l.b16 %v65
    %v74 = vunpack.c.l.b16 %v66
    %v75 = vunpack.c.l.b16 %v67
    %v76 = vpack.c.b16 %v73, %v72
    %v77 = vpack.c.b16 %v75, %v74
    %vm80 = vcmask 261120
    %v82 = vsel %vm80, %v62, 0
    %v85 = vsel %vm80, %v63, 0
    %87 = vmatpush.bf16.msra.mxu0 0
    %88 = vmatpush.bf16.msra.mxu0 0
    %89 = vmatpush.bf16.msra.mxu0 0
    %90 = vmatpush.bf16.msra.mxu0 0
    %91 = vmatpush.bf16.msra.mxu0 0
    %92 = vmatpush.bf16.msra.mxu0 0
    %93 = vmatpush.bf16.msra.mxu0 %v77
    %94 = vmatpush.bf16.msra.mxu0 %v76
    %95 = vmatmul.bf16.gmra.mxu0 %v82
    %v96 = vpop.f32.mrf.mxu0
    %v97 = vadd.f32 0.0, %v96
    %v98 = vpop.f32.mrf.mxu0
    %v99 = vadd.f32 0.0, %v98
    %100 = vmatmul.bf16.gmra.mxu0 %v85
    %v101 = vpop.f32.mrf.mxu0
    %v102 = vadd.f32 0.0, %v101
    %v103 = vpop.f32.mrf.mxu0
    %v104 = vadd.f32 0.0, %v103
    %105 = vdwg.mxu0
    %v106 = vadd.f32 %v54, %v97
    %v107 = vadd.f32 %v55, %v99
    %v108 = vadd.f32 %v56, %v102
    %v109 = vadd.f32 %v57, %v104
    %vm110 = vcmask 785408
    %111 = vst.msk [vmem:[#allocation2] sm:$0xff] %vm110, %v106
    %112 = vst.msk [vmem:[#allocation2 + $0x8] sm:$0xff] %vm110, %v107
    %113 = vst.msk [vmem:[#allocation2 + $0x10] sm:$0xff] %vm110, %v108
    %114 = vst.msk [vmem:[#allocation2 + $0x18] sm:$0xff] %vm110, %v109
    // Predicated region
    $region22: #{tpu_custom_call.1} parent=1 // pred_check
      %p115 = pneg %p45
    $region23: #{tpu_custom_call.1} parent=1 // pred_check_branch
      %117 = sbr.rel (%p115) target = $region25
    $region24: #{tpu_custom_call.1} parent=1 // pred_region
      %v118 = vld [vmem:[#allocation2] sm:$0xff]
      %v119 = vld [vmem:[#allocation2 + $0x8] sm:$0xff]
      %v120 = vld [vmem:[#allocation2 + $0x10] sm:$0xff]
      %v121 = vld [vmem:[#allocation2 + $0x18] sm:$0xff]
      %v122 = vpack.c.bf16 %v118, %v118
      %v123 = vpack.c.bf16 %v119, %v119
      %v124 = vpack.c.bf16 %v120, %v120
      %v125 = vpack.c.bf16 %v121, %v121
      %vm126 = vcmask 781312
      %127 = vst.msk [vmem:[#allocation8] sm:$0xf] %vm126, %v122
      %128 = vst.msk [vmem:[#allocation8 + $0x4] sm:$0xf] %vm126, %v123
      %129 = vst.msk [vmem:[#allocation8 + $0x8] sm:$0xf] %vm126, %v124
      %130 = vst.msk [vmem:[#allocation8 + $0xc] sm:$0xf] %vm126, %v125
    $region25: #{tpu_custom_call.1} parent=1 // pred_fallthru
      _
    // Predicated region
    $region26: #{tpu_custom_call.1} parent=1 // pred_check
      _
    $region27: #{tpu_custom_call.1} parent=1 // pred_check_branch
      %132 = sbr.rel (0) target = $region29
    $region28: #{tpu_custom_call.1} parent=1 // pred_region
      %134 = vsyncadd [#allocation5], 0
      %s135 = sshll.u32 [#allocation8], 4
      %s136 = int_to_ptr.vmem [resolvable:$true] %s135
      %s137 = sshll.u32 %s2, 4
      %s138 = int_to_ptr.hbm [resolvable:$true] %s137
      %143 = dma.vmem_to_hbm [thread:$0]  %s136, 256, %s138, [#allocation5], 64, 64, 4
    $region29: #{tpu_custom_call.1} parent=1 // pred_fallthru
      _
    // Predicated region
    $region30: #{tpu_custom_call.1} parent=1 // pred_check
      _
    $region31: #{tpu_custom_call.1} parent=1 // pred_check_branch
      %145 = sbr.rel (0) target = $region33
    $region32: #{tpu_custom_call.1} parent=1 // pred_region
      %147 = dma.done [#allocation5], 256
    $region33: #{tpu_custom_call.1} parent=1 // pred_fallthru
      _
    %148 = vsyncpa [#allocation4], 1
    %149 = vsyncpa [#allocation7], 1
    %150 = vsyncpa [#allocation5], 1

</llo_original>
